<compile_context>
chip_gen: v5e
topology: v5e:2x2
jax: 0.10.0
libtpu: 0.0.40
codegen_flags: <defaults>
</compile_context>

<pallas_src>
import functools

import jax
import jax.numpy as jnp
from jax.experimental import pallas as pl
from jax.experimental.pallas import tpu as pltpu


def _round_up(x, m):
    return (x + m - 1) // m * m


def _tpu_generation():
    """Best-effort TPU generation (5 / 6 / 7); 0 if unknown."""
    try:
        kind = jax.devices()[0].device_kind.lower()
    except Exception:
        kind = ""
    if "v7" in kind:
        return 7
    if "v6" in kind:
        return 6
    if "v5" in kind:
        return 5
    return 0


def _hw_params():
    gen = _tpu_generation()
    if gen >= 7:
        return dict(gen=gen, vmem_physical=64 * 1024 * 1024, two_cores=True)
    if gen in (5, 6):
        return dict(gen=gen, vmem_physical=128 * 1024 * 1024, two_cores=False)
    # Unknown chip: be conservative about physical VMEM.
    return dict(gen=gen, vmem_physical=64 * 1024 * 1024, two_cores=False)


def _feature_pad(d, gen):
    """Pad a feature dim: multiples of 256 on v6e/v7x when it exceeds 128
    (fills the 2x256x256 MXU), multiples of 128 otherwise / on v5e."""
    if gen >= 6 and d > 128:
        return _round_up(d, 256)
    return _round_up(d, 128)


def _feature_pad_and_block(d, gen, max_block=512):
    """Padded dim + block size for the K/N-tiled fallback. 512 is a multiple of
    both 128 and 256 so divisibility always holds."""
    dp = _feature_pad(d, gen)
    if dp > max_block:
        return _round_up(dp, max_block), max_block
    return dp, dp


def _block_spec(shape, index_map, buffers=None):
    """BlockSpec with optional pipeline_mode=pl.Buffered(n); falls back to the
    default double-buffered spec if the kwarg is unavailable."""
    if buffers is not None:
        try:
            return pl.BlockSpec(shape, index_map, pipeline_mode=pl.Buffered(buffers))
        except TypeError:
            pass
    return pl.BlockSpec(shape, index_map)


def _gelu_f32(y, approximate):
    if approximate:
        # tanh approximation runs on the EUP (separate bundle slot from the VALU).
        c = jnp.float32(0.7978845608028654)  # sqrt(2/pi)
        return 0.5 * y * (1.0 + jnp.tanh(c * (y + 0.044715 * y * y * y)))
    # exact GELU: 0.5*y*(1+erf(y/sqrt(2)))  (matches torch F.gelu default)
    return 0.5 * y * (1.0 + jax.lax.erf(y * jnp.float32(0.7071067811865476)))


# ---------------------------------------------------------------------------
# Path 1: fully fused MLP, all (padded) weights resident in VMEM.
# ---------------------------------------------------------------------------
def _fused_mlp_kernel(x_ref, *refs, num_layers, approx_gelu):
    """Entire MLP on one batch row tile; weights resident, activations in vregs."""
    o_ref = refs[-1]
    h = x_ref[...]                                   # operand dtype -> MXU
    for l in range(num_layers):
        w = refs[2 * l][...]                         # (K_pad, N_pad), resident
        b = refs[2 * l + 1][...]                     # (1, N_pad) f32, resident
        y = jnp.dot(h, w, preferred_element_type=jnp.float32) + b
        if l < num_layers - 1:
            y = _gelu_f32(y, approx_gelu)
            # TODO(synk): dropout with dropprob > 0 would need pltpu.prng_* masking;
            # default dropprob=0.0 makes it identity so it is omitted.
            h = y.astype(w.dtype)                    # next MXU pass in operand dtype
        else:
            o_ref[...] = y.astype(o_ref.dtype)


# ---------------------------------------------------------------------------
# Path 2: K/N-tiled per-layer fallback (weights too large to keep resident).
# ---------------------------------------------------------------------------
def _tiled_layer_kernel(x_ref, w_ref, b_ref, o_ref, acc_ref, *, apply_gelu, approx_gelu):
    @pl.when(pl.program_id(2) == 0)
    def _():
        acc_ref[...] = jnp.zeros_like(acc_ref)

    acc_ref[...] += jnp.dot(x_ref[...], w_ref[...], preferred_element_type=jnp.float32)

    @pl.when(pl.program_id(2) == pl.num_programs(2) - 1)
    def _():
        y = acc_ref[...] + b_ref[...]
        if apply_gelu:
            y = _gelu_f32(y, approx_gelu)
        o_ref[...] = y.astype(o_ref.dtype)


def _layer_forward_tiled(x_p, w_p, b_row, *, apply_gelu, approx_gelu,
                         bm, bn, bk, out_dtype, vmem_limit):
    m_p, k_p = x_p.shape
    _, n_p = w_p.shape
    grid = (m_p // bm, n_p // bn, k_p // bk)
    return pl.pallas_call(
        functools.partial(_tiled_layer_kernel, apply_gelu=apply_gelu,
                          approx_gelu=approx_gelu),
        out_shape=jax.ShapeDtypeStruct((m_p, n_p), out_dtype),
        grid_spec=pltpu.PrefetchScalarGridSpec(
            num_scalar_prefetch=0,
            grid=grid,
            in_specs=[pl.BlockSpec((bm, bk), lambda i, j, k: (i, k)),
                      pl.BlockSpec((bk, bn), lambda i, j, k: (k, j)),
                      pl.BlockSpec((1, bn), lambda i, j, k: (0, j))],
            out_specs=pl.BlockSpec((bm, bn), lambda i, j, k: (i, j)),
            scratch_shapes=[pltpu.VMEM((bm, bn), jnp.float32)]),
        compiler_params=pltpu.CompilerParams(
            dimension_semantics=("parallel", "parallel", "arbitrary"),
            vmem_limit_bytes=vmem_limit),
    )(x_p, w_p, b_row)


# ---------------------------------------------------------------------------
# Wrapper / dispatcher
# ---------------------------------------------------------------------------
def mlp_forward(x, params, *, block_m=512, use_bf16_operands=False,
                approximate_gelu=False, force_tiled=False):
    """x: (M, input_d); params: list of (W:(in,out), b:(out,)) per Linear layer."""
    M, K = x.shape
    num_layers = len(params)
    out_d = params[-1][0].shape[1]
    out_dtype = x.dtype
    op_dtype = jnp.bfloat16 if use_bf16_operands else x.dtype
    op_isz = jnp.dtype(op_dtype).itemsize
    out_isz = jnp.dtype(out_dtype).itemsize

    hw = _hw_params()
    gen = hw["gen"]

    # ---- feature dims, generation-aware lane-dense padding ----
    dims = [K] + [w.shape[1] for w, _ in params]
    dims_pad = [_feature_pad(d, gen) for d in dims]

    # ---- batch tile: sublane aligned, big by default, split for v7x megacore ----
    sublane = max(8, 32 // op_isz)
    m_pad = _round_up(M, sublane)
    bm = min(block_m, m_pad)
    if hw["two_cores"] and m_pad >= 2 * sublane:
        # guarantee >=2 row tiles so both TensorCores get work on v7x
        bm = min(bm, _round_up((m_pad + 1) // 2, sublane))
    bm = max(_round_up(bm, sublane), sublane)
    m_pad = _round_up(m_pad, bm)

    # ---- VMEM budget: resident-weight fused path vs K/N-tiled fallback ----
    w_bytes = sum(dims_pad[l] * dims_pad[l + 1] for l in range(num_layers)) * op_isz
    b_bytes = sum(dims_pad[1:]) * 4                        # f32 bias rows, single-buffered
    stream_bytes = 2 * bm * dims_pad[0] * op_isz + 2 * bm * dims_pad[-1] * out_isz
    inter_bytes = 2 * bm * max(dims_pad) * 4               # live f32 intermediates
    needed = w_bytes + b_bytes + stream_bytes + inter_bytes
    usable = int(hw["vmem_physical"] * 0.75)               # headroom for compiler scratch
    use_fused = (needed <= usable) and not force_tiled

    if use_fused:
        vmem_limit = int(min(usable, _round_up(needed + needed // 2 + (8 << 20), 1 << 20)))
        x_p = jnp.pad(x.astype(op_dtype), ((0, m_pad - M), (0, dims_pad[0] - K)))

        def run(weight_buffers):
            flat_wb = []
            in_specs = [_block_spec((bm, dims_pad[0]), lambda i: (i, 0))]   # streamed x tile
            for l, (w, b) in enumerate(params):
                kp, np_ = dims_pad[l], dims_pad[l + 1]
                w_p = jnp.pad(w.astype(op_dtype),
                              ((0, kp - w.shape[0]), (0, np_ - w.shape[1])))
                b_p = jnp.pad(b.astype(jnp.float32), (0, np_ - b.shape[0])).reshape(1, np_)
                flat_wb += [w_p, b_p]
                in_specs += [
                    _block_spec((kp, np_), lambda i: (0, 0), buffers=weight_buffers),
                    _block_spec((1, np_), lambda i: (0, 0), buffers=weight_buffers),
                ]
            kernel = functools.partial(_fused_mlp_kernel, num_layers=num_layers,
                                       approx_gelu=approximate_gelu)
            return pl.pallas_call(
                kernel,
                out_shape=jax.ShapeDtypeStruct((m_pad, dims_pad[-1]), out_dtype),
                grid_spec=pltpu.PrefetchScalarGridSpec(
                    num_scalar_prefetch=0,
                    grid=(m_pad // bm,),
                    in_specs=in_specs,
                    out_specs=pl.BlockSpec((bm, dims_pad[-1]), lambda i: (i, 0)),
                ),
                compiler_params=pltpu.CompilerParams(
                    dimension_semantics=("parallel",),    # row tiles across TCs (v7x)
                    vmem_limit_bytes=vmem_limit,
                ),
            )(x_p, *flat_wb)

        try:
            out_p = run(weight_buffers=1)      # single-buffer the resident weights/biases
        except Exception:
            out_p = run(weight_buffers=None)   # safety net: default pipelining
        return out_p[:M, :out_d]

    # ---- K/N-tiled fallback: weights streamed per tile, f32 VMEM accumulator ----
    h = jnp.pad(x.astype(op_dtype), ((0, m_pad - M), (0, 0)))
    for l, (w, b) in enumerate(params):
        kd, nd = w.shape
        kp, bk = _feature_pad_and_block(kd, gen)
        np_, bn = _feature_pad_and_block(nd, gen)
        h_p = jnp.pad(h, ((0, 0), (0, kp - h.shape[1])))
        w_p = jnp.pad(w.astype(op_dtype), ((0, kp - kd), (0, np_ - nd)))
        b_p = jnp.pad(b.astype(jnp.float32), (0, np_ - nd)).reshape(1, np_)
        apply_gelu = l < num_layers - 1
        # zero-padded W rows/cols and zero bias padding keep padded lanes exactly
        # zero (GELU(0)=0), so chaining padded activations layer-to-layer is exact.
        h = _layer_forward_tiled(
            h_p, w_p, b_p, apply_gelu=apply_gelu, approx_gelu=approximate_gelu,
            bm=bm, bn=bn, bk=bk,
            out_dtype=op_dtype if apply_gelu else out_dtype,
            vmem_limit=usable)
    return h[:M, :out_d]


# ---------------------------------------------------------------------------
# Reference / setup / self-test
# ---------------------------------------------------------------------------
def init_mlp_params(key, input_d, structure, output_d, dtype=jnp.float32):
    """Deterministic synthetic params, stored pre-transposed as (in, out)."""
    struc = [input_d] + list(structure) + [output_d]
    params = []
    for i in range(len(struc) - 1):
        key, kw, kb = jax.random.split(key, 3)
        fan_in, fan_out = struc[i], struc[i + 1]
        bound = 1.0 / jnp.sqrt(fan_in)
        w = jax.random.uniform(kw, (fan_in, fan_out), dtype, -bound, bound)
        b = jax.random.uniform(kb, (fan_out,), dtype, -bound, bound)
        params.append((w, b))
    return params


def mlp_reference(x, params):
    for w, b in params[:-1]:
        x = jax.nn.gelu(x @ w + b, approximate=False)
    w, b = params[-1]
    return x @ w + b


if __name__ == "__main__":
    key = jax.random.PRNGKey(0)
    batch, input_d, structure, output_d = 8, 32, [64, 48], 16

    kx, kp, kx2 = jax.random.split(key, 3)
    x = jax.random.normal(kx, (batch, input_d), jnp.float32)
    params = init_mlp_params(kp, input_d, structure, output_d)
    y_ref = mlp_reference(x, params)

    # fused (resident-weight) path
    y = mlp_forward(x, params)
    jax.block_until_ready(y)
    assert y.shape == (batch, output_d)
    assert jnp.allclose(y, y_ref, atol=1e-5, rtol=1e-5), "fused path mismatch"

    # K/N-tiled fallback path (forced so it is exercised even at tiny shapes)
    y_t = mlp_forward(x, params, force_tiled=True)
    jax.block_until_ready(y_t)
    assert jnp.allclose(y_t, y_ref, atol=1e-5, rtol=1e-5), "tiled path mismatch"

    # ragged batch / multi-row-tile fused path
    x2 = jax.random.normal(kx2, (300, input_d), jnp.float32)
    y2 = mlp_forward(x2, params, block_m=128)
    jax.block_until_ready(y2)
    y2_ref = mlp_reference(x2, params)
    assert y2.shape == (300, output_d)
    assert jnp.allclose(y2, y2_ref, atol=1e-5, rtol=1e-5), "multi-tile path mismatch"

    print("KERNEL_OK")
</pallas_src>

<mosaic_0001>
module attributes {stable_mosaic.version = 11 : i64} {
  func.func @_fused_mlp_kernel(%arg0: i32, %arg1: memref<8x128xf32, #tpu.memory_space<vmem>>, %arg2: memref<128x128xf32, #tpu.memory_space<vmem>>, %arg3: memref<1x128xf32, #tpu.memory_space<vmem>>, %arg4: memref<128x128xf32, #tpu.memory_space<vmem>>, %arg5: memref<1x128xf32, #tpu.memory_space<vmem>>, %arg6: memref<128x128xf32, #tpu.memory_space<vmem>>, %arg7: memref<1x128xf32, #tpu.memory_space<vmem>>, %arg8: memref<8x128xf32, #tpu.memory_space<vmem>>) attributes {dimension_semantics = [#tpu.dimension_semantics<parallel>], iteration_bounds = array<i64: 1>, scalar_prefetch = 0 : i64, scratch_operands = 0 : i64, tpu.core_type = #tpu.core_type<tc>, window_params = [{transform_indices = @transform_0, window_bounds = array<i64: 8, 128>}, {pipeline_mode = #tpu.pipeline_mode<synchronous>, transform_indices = @transform_1, window_bounds = array<i64: 128, 128>}, {pipeline_mode = #tpu.pipeline_mode<synchronous>, transform_indices = @transform_2, window_bounds = array<i64: 1, 128>}, {pipeline_mode = #tpu.pipeline_mode<synchronous>, transform_indices = @transform_3, window_bounds = array<i64: 128, 128>}, {pipeline_mode = #tpu.pipeline_mode<synchronous>, transform_indices = @transform_4, window_bounds = array<i64: 1, 128>}, {pipeline_mode = #tpu.pipeline_mode<synchronous>, transform_indices = @transform_5, window_bounds = array<i64: 128, 128>}, {pipeline_mode = #tpu.pipeline_mode<synchronous>, transform_indices = @transform_6, window_bounds = array<i64: 1, 128>}, {transform_indices = @transform_7, window_bounds = array<i64: 8, 128>}]} {
    %c0 = arith.constant 0 : index
    %c0_0 = arith.constant 0 : index
    %0 = vector.load %arg1[%c0, %c0_0] : memref<8x128xf32, #tpu.memory_space<vmem>>, vector<8x128xf32>
    %c0_1 = arith.constant 0 : index
    %c0_2 = arith.constant 0 : index
    %1 = vector.load %arg2[%c0_1, %c0_2] : memref<128x128xf32, #tpu.memory_space<vmem>>, vector<128x128xf32>
    %c0_3 = arith.constant 0 : index
    %c0_4 = arith.constant 0 : index
    %2 = vector.load %arg3[%c0_3, %c0_4] : memref<1x128xf32, #tpu.memory_space<vmem>>, vector<1x128xf32>
    %cst = arith.constant dense<0.000000e+00> : vector<8x128xf32>
    %3 = tpu.matmul %0, %1, %cst {dimension_numbers = #tpu.dot_dimension_numbers<[1], [0], [0], [1], [0, 0, 1, 1], [], []>} : vector<8x128xf32>, vector<128x128xf32>, vector<8x128xf32> -> vector<8x128xf32>
    %4 = vector.broadcast %2 : vector<1x128xf32> to vector<8x128xf32>
    %5 = arith.addf %3, %4 : vector<8x128xf32>
    %cst_5 = arith.constant 5.000000e-01 : f32
    %6 = vector.broadcast %cst_5 : f32 to vector<8x128xf32>
    %7 = arith.mulf %6, %5 : vector<8x128xf32>
    %cst_6 = arith.constant 0.707106769 : f32
    %8 = vector.broadcast %cst_6 : f32 to vector<8x128xf32>
    %9 = arith.mulf %5, %8 : vector<8x128xf32>
    %10 = math.erf %9 : vector<8x128xf32>
    %cst_7 = arith.constant 1.000000e+00 : f32
    %11 = vector.broadcast %cst_7 : f32 to vector<8x128xf32>
    %12 = arith.addf %11, %10 : vector<8x128xf32>
    %13 = arith.mulf %7, %12 : vector<8x128xf32>
    %c0_8 = arith.constant 0 : index
    %c0_9 = arith.constant 0 : index
    %14 = vector.load %arg4[%c0_8, %c0_9] : memref<128x128xf32, #tpu.memory_space<vmem>>, vector<128x128xf32>
    %c0_10 = arith.constant 0 : index
    %c0_11 = arith.constant 0 : index
    %15 = vector.load %arg5[%c0_10, %c0_11] : memref<1x128xf32, #tpu.memory_space<vmem>>, vector<1x128xf32>
    %cst_12 = arith.constant dense<0.000000e+00> : vector<8x128xf32>
    %16 = tpu.matmul %13, %14, %cst_12 {dimension_numbers = #tpu.dot_dimension_numbers<[1], [0], [0], [1], [0, 0, 1, 1], [], []>} : vector<8x128xf32>, vector<128x128xf32>, vector<8x128xf32> -> vector<8x128xf32>
    %17 = vector.broadcast %15 : vector<1x128xf32> to vector<8x128xf32>
    %18 = arith.addf %16, %17 : vector<8x128xf32>
    %cst_13 = arith.constant 5.000000e-01 : f32
    %19 = vector.broadcast %cst_13 : f32 to vector<8x128xf32>
    %20 = arith.mulf %19, %18 : vector<8x128xf32>
    %cst_14 = arith.constant 0.707106769 : f32
    %21 = vector.broadcast %cst_14 : f32 to vector<8x128xf32>
    %22 = arith.mulf %18, %21 : vector<8x128xf32>
    %23 = math.erf %22 : vector<8x128xf32>
    %cst_15 = arith.constant 1.000000e+00 : f32
    %24 = vector.broadcast %cst_15 : f32 to vector<8x128xf32>
    %25 = arith.addf %24, %23 : vector<8x128xf32>
    %26 = arith.mulf %20, %25 : vector<8x128xf32>
    %c0_16 = arith.constant 0 : index
    %c0_17 = arith.constant 0 : index
    %27 = vector.load %arg6[%c0_16, %c0_17] : memref<128x128xf32, #tpu.memory_space<vmem>>, vector<128x128xf32>
    %c0_18 = arith.constant 0 : index
    %c0_19 = arith.constant 0 : index
    %28 = vector.load %arg7[%c0_18, %c0_19] : memref<1x128xf32, #tpu.memory_space<vmem>>, vector<1x128xf32>
    %cst_20 = arith.constant dense<0.000000e+00> : vector<8x128xf32>
    %29 = tpu.matmul %26, %27, %cst_20 {dimension_numbers = #tpu.dot_dimension_numbers<[1], [0], [0], [1], [0, 0, 1, 1], [], []>} : vector<8x128xf32>, vector<128x128xf32>, vector<8x128xf32> -> vector<8x128xf32>
    %30 = vector.broadcast %28 : vector<1x128xf32> to vector<8x128xf32>
    %31 = arith.addf %29, %30 : vector<8x128xf32>
    %c0_21 = arith.constant 0 : index
    %c0_22 = arith.constant 0 : index
    %32 = vector.load %arg8[%c0_21, %c0_22] : memref<8x128xf32, #tpu.memory_space<vmem>>, vector<8x128xf32>
    tpu.vector_store %arg8[%c0_21, %c0_22], %31 {strides = array<i32>} : memref<8x128xf32, #tpu.memory_space<vmem>>, vector<8x128xf32>,
    return
  }
  func.func @transform_0(%arg0: i32) -> (i32, i32) {
    %c0_i32 = arith.constant 0 : i32
    %c0_i32_0 = arith.constant 0 : i32
    return %arg0, %c0_i32 : i32, i32
  }
  func.func @transform_1(%arg0: i32) -> (i32, i32) {
    %c0_i32 = arith.constant 0 : i32
    %c0_i32_0 = arith.constant 0 : i32
    %c0_i32_1 = arith.constant 0 : i32
    return %c0_i32, %c0_i32_0 : i32, i32
  }
  func.func @transform_2(%arg0: i32) -> (i32, i32) {
    %c0_i32 = arith.constant 0 : i32
    %c0_i32_0 = arith.constant 0 : i32
    %c0_i32_1 = arith.constant 0 : i32
    return %c0_i32, %c0_i32_0 : i32, i32
  }
  func.func @transform_3(%arg0: i32) -> (i32, i32) {
    %c0_i32 = arith.constant 0 : i32
    %c0_i32_0 = arith.constant 0 : i32
    %c0_i32_1 = arith.constant 0 : i32
    return %c0_i32, %c0_i32_0 : i32, i32
  }
  func.func @transform_4(%arg0: i32) -> (i32, i32) {
    %c0_i32 = arith.constant 0 : i32
    %c0_i32_0 = arith.constant 0 : i32
    %c0_i32_1 = arith.constant 0 : i32
    return %c0_i32, %c0_i32_0 : i32, i32
  }
  func.func @transform_5(%arg0: i32) -> (i32, i32) {
    %c0_i32 = arith.constant 0 : i32
    %c0_i32_0 = arith.constant 0 : i32
    %c0_i32_1 = arith.constant 0 : i32
    return %c0_i32, %c0_i32_0 : i32, i32
  }
  func.func @transform_6(%arg0: i32) -> (i32, i32) {
    %c0_i32 = arith.constant 0 : i32
    %c0_i32_0 = arith.constant 0 : i32
    %c0_i32_1 = arith.constant 0 : i32
    return %c0_i32, %c0_i32_0 : i32, i32
  }
  func.func @transform_7(%arg0: i32) -> (i32, i32) {
    %c0_i32 = arith.constant 0 : i32
    %c0_i32_0 = arith.constant 0 : i32
    return %arg0, %c0_i32 : i32, i32
  }
}

module attributes {stable_mosaic.version = 11 : i64} {
  func.func @_fused_mlp_kernel(%arg0: i32, %arg1: memref<8x128xf32, #tpu.memory_space<vmem>>, %arg2: memref<128x128xf32, #tpu.memory_space<vmem>>, %arg3: memref<1x128xf32, #tpu.memory_space<vmem>>, %arg4: memref<128x128xf32, #tpu.memory_space<vmem>>, %arg5: memref<1x128xf32, #tpu.memory_space<vmem>>, %arg6: memref<128x128xf32, #tpu.memory_space<vmem>>, %arg7: memref<1x128xf32, #tpu.memory_space<vmem>>, %arg8: memref<8x128xf32, #tpu.memory_space<vmem>>) attributes {dimension_semantics = [#tpu.dimension_semantics<parallel>], iteration_bounds = array<i64: 1>, scalar_prefetch = 0 : i64, scratch_operands = 0 : i64, tpu.core_type = #tpu.core_type<tc>, window_params = [{transform_indices = @transform_0, window_bounds = array<i64: 8, 128>}, {pipeline_mode = #tpu.pipeline_mode<synchronous>, transform_indices = @transform_1, window_bounds = array<i64: 128, 128>}, {pipeline_mode = #tpu.pipeline_mode<synchronous>, transform_indices = @transform_2, window_bounds = array<i64: 1, 128>}, {pipeline_mode = #tpu.pipeline_mode<synchronous>, transform_indices = @transform_3, window_bounds = array<i64: 128, 128>}, {pipeline_mode = #tpu.pipeline_mode<synchronous>, transform_indices = @transform_4, window_bounds = array<i64: 1, 128>}, {pipeline_mode = #tpu.pipeline_mode<synchronous>, transform_indices = @transform_5, window_bounds = array<i64: 128, 128>}, {pipeline_mode = #tpu.pipeline_mode<synchronous>, transform_indices = @transform_6, window_bounds = array<i64: 1, 128>}, {transform_indices = @transform_7, window_bounds = array<i64: 8, 128>}]} {
    %c0 = arith.constant 0 : index
    %c0_0 = arith.constant 0 : index
    %0 = vector.load %arg1[%c0, %c0_0] : memref<8x128xf32, #tpu.memory_space<vmem>>, vector<8x128xf32>
    %c0_1 = arith.constant 0 : index
    %c0_2 = arith.constant 0 : index
    %1 = vector.load %arg2[%c0_1, %c0_2] : memref<128x128xf32, #tpu.memory_space<vmem>>, vector<128x128xf32>
    %c0_3 = arith.constant 0 : index
    %c0_4 = arith.constant 0 : index
    %2 = vector.load %arg3[%c0_3, %c0_4] : memref<1x128xf32, #tpu.memory_space<vmem>>, vector<1x128xf32>
    %cst = arith.constant dense<0.000000e+00> : vector<8x128xf32>
    %3 = tpu.matmul %0, %1, %cst {dimension_numbers = #tpu.dot_dimension_numbers<[1], [0], [0], [1], [0, 0, 1, 1], [], []>} : vector<8x128xf32>, vector<128x128xf32>, vector<8x128xf32> -> vector<8x128xf32>
    %4 = vector.broadcast %2 : vector<1x128xf32> to vector<8x128xf32>
    %5 = arith.addf %3, %4 : vector<8x128xf32>
    %cst_5 = arith.constant 5.000000e-01 : f32
    %6 = vector.broadcast %cst_5 : f32 to vector<8x128xf32>
    %7 = arith.mulf %6, %5 : vector<8x128xf32>
    %cst_6 = arith.constant 0.707106769 : f32
    %8 = vector.broadcast %cst_6 : f32 to vector<8x128xf32>
    %9 = arith.mulf %5, %8 : vector<8x128xf32>
    %10 = math.erf %9 : vector<8x128xf32>
    %cst_7 = arith.constant 1.000000e+00 : f32
    %11 = vector.broadcast %cst_7 : f32 to vector<8x128xf32>
    %12 = arith.addf %11, %10 : vector<8x128xf32>
    %13 = arith.mulf %7, %12 : vector<8x128xf32>
    %c0_8 = arith.constant 0 : index
    %c0_9 = arith.constant 0 : index
    %14 = vector.load %arg4[%c0_8, %c0_9] : memref<128x128xf32, #tpu.memory_space<vmem>>, vector<128x128xf32>
    %c0_10 = arith.constant 0 : index
    %c0_11 = arith.constant 0 : index
    %15 = vector.load %arg5[%c0_10, %c0_11] : memref<1x128xf32, #tpu.memory_space<vmem>>, vector<1x128xf32>
    %cst_12 = arith.constant dense<0.000000e+00> : vector<8x128xf32>
    %16 = tpu.matmul %13, %14, %cst_12 {dimension_numbers = #tpu.dot_dimension_numbers<[1], [0], [0], [1], [0, 0, 1, 1], [], []>} : vector<8x128xf32>, vector<128x128xf32>, vector<8x128xf32> -> vector<8x128xf32>
    %17 = vector.broadcast %15 : vector<1x128xf32> to vector<8x128xf32>
    %18 = arith.addf %16, %17 : vector<8x128xf32>
    %cst_13 = arith.constant 5.000000e-01 : f32
    %19 = vector.broadcast %cst_13 : f32 to vector<8x128xf32>
    %20 = arith.mulf %19, %18 : vector<8x128xf32>
    %cst_14 = arith.constant 0.707106769 : f32
    %21 = vector.broadcast %cst_14 : f32 to vector<8x128xf32>
    %22 = arith.mulf %18, %21 : vector<8x128xf32>
    %23 = math.erf %22 : vector<8x128xf32>
    %cst_15 = arith.constant 1.000000e+00 : f32
    %24 = vector.broadcast %cst_15 : f32 to vector<8x128xf32>
    %25 = arith.addf %24, %23 : vector<8x128xf32>
    %26 = arith.mulf %20, %25 : vector<8x128xf32>
    %c0_16 = arith.constant 0 : index
    %c0_17 = arith.constant 0 : index
    %27 = vector.load %arg6[%c0_16, %c0_17] : memref<128x128xf32, #tpu.memory_space<vmem>>, vector<128x128xf32>
    %c0_18 = arith.constant 0 : index
    %c0_19 = arith.constant 0 : index
    %28 = vector.load %arg7[%c0_18, %c0_19] : memref<1x128xf32, #tpu.memory_space<vmem>>, vector<1x128xf32>
    %cst_20 = arith.constant dense<0.000000e+00> : vector<8x128xf32>
    %29 = tpu.matmul %26, %27, %cst_20 {dimension_numbers = #tpu.dot_dimension_numbers<[1], [0], [0], [1], [0, 0, 1, 1], [], []>} : vector<8x128xf32>, vector<128x128xf32>, vector<8x128xf32> -> vector<8x128xf32>
    %30 = vector.broadcast %28 : vector<1x128xf32> to vector<8x128xf32>
    %31 = arith.addf %29, %30 : vector<8x128xf32>
    %c0_21 = arith.constant 0 : index
    %c0_22 = arith.constant 0 : index
    %32 = vector.load %arg8[%c0_21, %c0_22] : memref<8x128xf32, #tpu.memory_space<vmem>>, vector<8x128xf32>
    tpu.vector_store %arg8[%c0_21, %c0_22], %31 {strides = array<i32>} : memref<8x128xf32, #tpu.memory_space<vmem>>, vector<8x128xf32>,
    return
  }
  func.func @transform_0(%arg0: i32) -> (i32, i32) {
    %c0_i32 = arith.constant 0 : i32
    %c0_i32_0 = arith.constant 0 : i32
    return %arg0, %c0_i32 : i32, i32
  }
  func.func @transform_1(%arg0: i32) -> (i32, i32) {
    %c0_i32 = arith.constant 0 : i32
    %c0_i32_0 = arith.constant 0 : i32
    %c0_i32_1 = arith.constant 0 : i32
    return %c0_i32, %c0_i32_0 : i32, i32
  }
  func.func @transform_2(%arg0: i32) -> (i32, i32) {
    %c0_i32 = arith.constant 0 : i32
    %c0_i32_0 = arith.constant 0 : i32
    %c0_i32_1 = arith.constant 0 : i32
    return %c0_i32, %c0_i32_0 : i32, i32
  }
  func.func @transform_3(%arg0: i32) -> (i32, i32) {
    %c0_i32 = arith.constant 0 : i32
    %c0_i32_0 = arith.constant 0 : i32
    %c0_i32_1 = arith.constant 0 : i32
    return %c0_i32, %c0_i32_0 : i32, i32
  }
  func.func @transform_4(%arg0: i32) -> (i32, i32) {
    %c0_i32 = arith.constant 0 : i32
    %c0_i32_0 = arith.constant 0 : i32
    %c0_i32_1 = arith.constant 0 : i32
    return %c0_i32, %c0_i32_0 : i32, i32
  }
  func.func @transform_5(%arg0: i32) -> (i32, i32) {
    %c0_i32 = arith.constant 0 : i32
    %c0_i32_0 = arith.constant 0 : i32
    %c0_i32_1 = arith.constant 0 : i32
    return %c0_i32, %c0_i32_0 : i32, i32
  }
  func.func @transform_6(%arg0: i32) -> (i32, i32) {
    %c0_i32 = arith.constant 0 : i32
    %c0_i32_0 = arith.constant 0 : i32
    %c0_i32_1 = arith.constant 0 : i32
    return %c0_i32, %c0_i32_0 : i32, i32
  }
  func.func @transform_7(%arg0: i32) -> (i32, i32) {
    %c0_i32 = arith.constant 0 : i32
    %c0_i32_0 = arith.constant 0 : i32
    return %arg0, %c0_i32 : i32, i32
  }
}

</mosaic_0001>

<llo_original>
// kernel: tpu_custom_call.1
$region0: #{tpu_custom_call.1}
  #allocation0 [shape = 'u32[]', space=smem, size = 0x4, offset = 0x4, fixed_abs, tag = 'smem constant byte address 0x4 - core index']
  #allocation1 [shape = 'u32[72,128]{1,0:T(1,128)}', space=vmem, size = 0x9000, scoped, tag = 'internal scratch']
  %s0 = inlined_call_operand.hbm [shape: f32[8,128], index: 0, kind: input, shape index: {}]
  %s1 = inlined_call_operand.hbm [shape: f32[128,128], index: 1, kind: input, shape index: {}]
  %s2 = inlined_call_operand.vmem [shape: f32[1,128], index: 2, kind: input, shape index: {}]
  %s3 = inlined_call_operand.hbm [shape: f32[128,128], index: 3, kind: input, shape index: {}]
  %s4 = inlined_call_operand.vmem [shape: f32[1,128], index: 4, kind: input, shape index: {}]
  %s5 = inlined_call_operand.hbm [shape: f32[128,128], index: 5, kind: input, shape index: {}]
  %s6 = inlined_call_operand.vmem [shape: f32[1,128], index: 6, kind: input, shape index: {}]
  %s7 = inlined_call_operand.hbm [shape: f32[8,128], index: 7, kind: output, shape index: {}]
  %s8 = sld [smem:[#allocation0]]
  $region54: #{tpu_custom_call.1} parent=0
    _
  %s10 = ssub.s32 1, %s8
  %s11 = scalar_select 0, %s10, %s8
  $region1: #{tpu_custom_call.1} parent=0
    #allocation2 [shape = 'u8[4096]{0}', space=vmem, size = 0x1000, scoped, tag = 'input window, operand 0, single buffered']
    #allocation3 [shape = 's32[1]{0}', space=sflag, size = 0x4, scoped, tag = 'scoped memory for tpu_custom_call.1']
    #allocation4 [shape = 's32[1]{0}', space=sflag, size = 0x4, scoped, tag = 'scoped memory for tpu_custom_call.1']
    #allocation5 [shape = 'u8[65536]{0}', space=vmem, size = 0x10000, scoped, tag = 'input window, operand 1, single buffered']
    #allocation6 [shape = 's32[1]{0}', space=sflag, size = 0x4, scoped, tag = 'scoped memory for tpu_custom_call.1']
    #allocation7 [shape = 'u8[65536]{0}', space=vmem, size = 0x10000, scoped, tag = 'input window, operand 3, single buffered']
    #allocation8 [shape = 'u8[65536]{0}', space=vmem, size = 0x10000, scoped, tag = 'input window, operand 5, single buffered']
    #allocation9 [shape = 's32[1]{0}', space=sflag, size = 0x4, scoped, tag = 'scoped memory for tpu_custom_call.1']
    #allocation10 [shape = 'u8[4096]{0}', space=vmem, size = 0x1000, scoped, tag = 'output window, operand 0, single buffered']
    %12 = vsyncpa [#allocation3], 0
    %13 = vsyncpa [#allocation6], 0
    %14 = vsyncpa [#allocation9], 0
    %15 = vsyncpa [#allocation4], 0
    // Predicated region
    $region2: #{tpu_custom_call.1} parent=1 // pred_check
      _
    $region3: #{tpu_custom_call.1} parent=1 // pred_check_branch
      %17 = sbr.rel (0) target = $region5
    $region4: #{tpu_custom_call.1} parent=1 // pred_region
      %19 = vsyncadd [#allocation3], 0
      %s21 = sshll.u32 %s0, 4
      %s22 = int_to_ptr.hbm [resolvable:$true] %s21
      %s23 = sshll.u32 [#allocation2], 4
      %s24 = int_to_ptr.vmem [resolvable:$true] %s23
      %26 = dma.hbm_to_vmem [thread:$0]  %s22, 128, %s24, [#allocation3]
    $region5: #{tpu_custom_call.1} parent=1 // pred_fallthru
      _
    // Predicated region
    $region6: #{tpu_custom_call.1} parent=1 // pred_check
      _
    $region7: #{tpu_custom_call.1} parent=1 // pred_check_branch
      %28 = sbr.rel (0) target = $region9
    $region8: #{tpu_custom_call.1} parent=1 // pred_region
      %30 = vsyncadd [#allocation6], 0
      %s31 = sshll.u32 %s1, 4
      %s32 = int_to_ptr.hbm [resolvable:$true] %s31
      %s33 = sshll.u32 [#allocation5], 4
      %s34 = int_to_ptr.vmem [resolvable:$true] %s33
      %39 = dma.hbm_to_vmem [thread:$0]  %s32, 2048, %s34, [#allocation6], 128, 128, 8
    $region9: #{tpu_custom_call.1} parent=1 // pred_fallthru
      _
    // Predicated region
    $region10: #{tpu_custom_call.1} parent=1 // pred_check
      _
    $region11: #{tpu_custom_call.1} parent=1 // pred_check_branch
      %41 = sbr.rel (0) target = $region13
    $region12: #{tpu_custom_call.1} parent=1 // pred_region
      _
    $region13: #{tpu_custom_call.1} parent=1 // pred_fallthru
      _
    // Predicated region
    $region14: #{tpu_custom_call.1} parent=1 // pred_check
      _
    $region15: #{tpu_custom_call.1} parent=1 // pred_check_branch
      %43 = sbr.rel (0) target = $region17
    $region16: #{tpu_custom_call.1} parent=1 // pred_region
      %45 = vsyncadd [#allocation6], 0
      %s46 = sshll.u32 %s3, 4
      %s47 = int_to_ptr.hbm [resolvable:$true] %s46
      %s48 = sshll.u32 [#allocation7], 4
      %s49 = int_to_ptr.vmem [resolvable:$true] %s48
      %54 = dma.hbm_to_vmem [thread:$0]  %s47, 2048, %s49, [#allocation6], 128, 128, 8
    $region17: #{tpu_custom_call.1} parent=1 // pred_fallthru
      _
    // Predicated region
    $region18: #{tpu_custom_call.1} parent=1 // pred_check
      _
    $region19: #{tpu_custom_call.1} parent=1 // pred_check_branch
      %56 = sbr.rel (0) target = $region21
    $region20: #{tpu_custom_call.1} parent=1 // pred_region
      _
    $region21: #{tpu_custom_call.1} parent=1 // pred_fallthru
      _
    // Predicated region
    $region22: #{tpu_custom_call.1} parent=1 // pred_check
      _
    $region23: #{tpu_custom_call.1} parent=1 // pred_check_branch
      %58 = sbr.rel (0) target = $region25
    $region24: #{tpu_custom_call.1} parent=1 // pred_region
      %60 = vsyncadd [#allocation9], 0
      %s61 = sshll.u32 %s5, 4
      %s62 = int_to_ptr.hbm [resolvable:$true] %s61
      %s63 = sshll.u32 [#allocation8], 4
      %s64 = int_to_ptr.vmem [resolvable:$true] %s63
      %69 = dma.hbm_to_vmem [thread:$0]  %s62, 2048, %s64, [#allocation9], 128, 128, 8
    $region25: #{tpu_custom_call.1} parent=1 // pred_fallthru
      _
    // Predicated region
    $region26: #{tpu_custom_call.1} parent=1 // pred_check
      _
    $region27: #{tpu_custom_call.1} parent=1 // pred_check_branch
      %71 = sbr.rel (0) target = $region29
    $region28: #{tpu_custom_call.1} parent=1 // pred_region
      _
    $region29: #{tpu_custom_call.1} parent=1 // pred_fallthru
      _
    // Predicated region
    $region30: #{tpu_custom_call.1} parent=1 // pred_check
      _
    $region31: #{tpu_custom_call.1} parent=1 // pred_check_branch
      %73 = sbr.rel (0) target = $region33
    $region32: #{tpu_custom_call.1} parent=1 // pred_region
      %75 = dma.done [#allocation3], 128
    $region33: #{tpu_custom_call.1} parent=1 // pred_fallthru
      _
    // Predicated region
    $region34: #{tpu_custom_call.1} parent=1 // pred_check
      _
    $region35: #{tpu_custom_call.1} parent=1 // pred_check_branch
      %77 = sbr.rel (0) target = $region37
    $region36: #{tpu_custom_call.1} parent=1 // pred_region
      %79 = dma.done [#allocation6], 2048
    $region37: #{tpu_custom_call.1} parent=1 // pred_fallthru
      _
    // Predicated region
    $region38: #{tpu_custom_call.1} parent=1 // pred_check
      _
    $region39: #{tpu_custom_call.1} parent=1 // pred_check_branch
      %81 = sbr.rel (0) target = $region41
    $region40: #{tpu_custom_call.1} parent=1 // pred_region
      %83 = dma.done [#allocation6], 2048
    $region41: #{tpu_custom_call.1} parent=1 // pred_fallthru
      _
    // Predicated region
    $region42: #{tpu_custom_call.1} parent=1 // pred_check
      _
    $region43: #{tpu_custom_call.1} parent=1 // pred_check_branch
      %85 = sbr.rel (0) target = $region45
    $region44: #{tpu_custom_call.1} parent=1 // pred_region
      %87 = dma.done [#allocation9], 2048
    $region45: #{tpu_custom_call.1} parent=1 // pred_fallthru
      _
    %v88 = vld [vmem:[#allocation2] sm:$0xff]
    %v89 = vld [vmem:[#allocation5] sm:$0xff]
    %v90 = vld [vmem:[#allocation5 + $0x8] sm:$0xff]
    %v91 = vld [vmem:[#allocation5 + $0x10] sm:$0xff]
    %v92 = vld [vmem:[#allocation5 + $0x18] sm:$0xff]
    %v93 = vld [vmem:[#allocation5 + $0x20] sm:$0xff]
    %v94 = vld [vmem:[#allocation5 + $0x28] sm:$0xff]
    %v95 = vld [vmem:[#allocation5 + $0x30] sm:$0xff]
    %v96 = vld [vmem:[#allocation5 + $0x38] sm:$0xff]
    %v97 = vld [vmem:[#allocation5 + $0x40] sm:$0xff]
    %v98 = vld [vmem:[#allocation5 + $0x48] sm:$0xff]
    %v99 = vld [vmem:[#allocation5 + $0x50] sm:$0xff]
    %v100 = vld [vmem:[#allocation5 + $0x58] sm:$0xff]
    %v101 = vld [vmem:[#allocation5 + $0x60] sm:$0xff]
    %v102 = vld [vmem:[#allocation5 + $0x68] sm:$0xff]
    %v103 = vld [vmem:[#allocation5 + $0x70] sm:$0xff]
    %v104 = vld [vmem:[#allocation5 + $0x78] sm:$0xff]
    %v105 = vld [vmem:[%s2] sm:$0x1]
    %v107 = vperm.slane %v105, 0
    %109 = vmatpush.msra.mxu0 %v104
    %110 = vmatpush.msra.mxu0 %v103
    %111 = vmatpush.msra.mxu0 %v102
    %112 = vmatpush.msra.mxu0 %v101
    %113 = vmatpush.msra.mxu0 %v100
    %114 = vmatpush.msra.mxu0 %v99
    %115 = vmatpush.msra.mxu0 %v98
    %116 = vmatpush.msra.mxu0 %v97
    %117 = vmatpush.msra.mxu0 %v96
    %118 = vmatpush.msra.mxu0 %v95
    %119 = vmatpush.msra.mxu0 %v94
    %120 = vmatpush.msra.mxu0 %v93
    %121 = vmatpush.msra.mxu0 %v92
    %122 = vmatpush.msra.mxu0 %v91
    %123 = vmatpush.msra.mxu0 %v90
    %124 = vmatpush.msra.mxu0 %v89
    %125 = vmatmul.f32.gmra.mxu0 %v88
    %v126 = vpop.f32.mrf.mxu0
    %v127 = vadd.f32 %v107, %v126
    %128 = vdwg.mxu0
    %v129 = vmul.f32 %v127, 0.5
    %v130 = vmul.f32 %v127, 0.70710677
    %v131 = vmul.f32 %v130, %v130
    %v132 = vmin.f32 16.0, %v131
    %v133 = vmul.f32 %v132, 2.1237322e-06
    %v134 = vadd.f32 %v133, 0.00028619796
    %v135 = vmul.f32 %v132, %v134
    %v136 = vadd.f32 %v135, 0.0036580483
    %v137 = vmul.f32 %v132, %v136
    %v138 = vadd.f32 %v137, 0.05243302
    %v139 = vmul.f32 %v132, %v138
    %v140 = vadd.f32 %v139, 0.18741608
    %v141 = vmul.f32 %v132, %v140
    %v142 = vadd.f32 %v141, 1.1283791
    %v143 = vmul.f32 %v130, %v142
    %v144 = vmul.f32 %v132, 3.8918573e-05
    %v145 = vadd.f32 %v144, 0.001143296
    %v146 = vmul.f32 %v132, %v145
    %v147 = vadd.f32 %v146, 0.014752088
    %v148 = vmul.f32 %v132, %v147
    %v149 = vadd.f32 %v148, 0.112945676
    %v150 = vmul.f32 %v132, %v149
    %v151 = vadd.f32 %v150, 0.4994258
    %v152 = vmul.f32 %v132, %v151
    %v153 = vadd.f32 %v152, 1.0
    %v154 = vrcp.pop %v153
    %v155 = vmul.f32 %v153, %v154
    %v156 = vsub.f32 1.0, %v155
    %v157 = vmul.f32 %v154, %v156
    %v158 = vadd.f32 %v154, %v157
    %vm159 = vweird.f32 %v153
    %vm160 = vweird.f32 %v154
    %vm161 = vmor %vm159, %vm160
    %v162 = vsel %vm161, %v154, %v158
    %v163 = vand.u32 2147483647, %v153
    %vm164 = vcmp.eq.f32.partialorder %v163, 8.507059e+37
    %v165 = vand.u32 %v153, 2147483648
    %v166 = vor.u32 1.1754944e-38, %v165
    %v167 = vsel %vm164, %v166, %v162
    %v168 = vmul.f32 %v143, %v167
    %v169 = vmin.f32 %v168, 1.0
    %v170 = vmax.f32 %v169, -1.0
    %v171 = vadd.f32 %v170, 1.0
    %v172 = vmul.f32 %v129, %v171
    %v173 = vld [vmem:[#allocation7] sm:$0xff]
    %v174 = vld [vmem:[#allocation7 + $0x8] sm:$0xff]
    %v175 = vld [vmem:[#allocation7 + $0x10] sm:$0xff]
    %v176 = vld [vmem:[#allocation7 + $0x18] sm:$0xff]
    %v177 = vld [vmem:[#allocation7 + $0x20] sm:$0xff]
    %v178 = vld [vmem:[#allocation7 + $0x28] sm:$0xff]
    %v179 = vld [vmem:[#allocation7 + $0x30] sm:$0xff]
    %v180 = vld [vmem:[#allocation7 + $0x38] sm:$0xff]
    %v181 = vld [vmem:[#allocation7 + $0x40] sm:$0xff]
    %v182 = vld [vmem:[#allocation7 + $0x48] sm:$0xff]
    %v183 = vld [vmem:[#allocation7 + $0x50] sm:$0xff]
    %v184 = vld [vmem:[#allocation7 + $0x58] sm:$0xff]
    %v185 = vld [vmem:[#allocation7 + $0x60] sm:$0xff]
    %v186 = vld [vmem:[#allocation7 + $0x68] sm:$0xff]
    %v187 = vld [vmem:[#allocation7 + $0x70] sm:$0xff]
    %v188 = vld [vmem:[#allocation7 + $0x78] sm:$0xff]
    %v189 = vld [vmem:[%s4] sm:$0x1]
    %v191 = vperm.slane %v189, 0
    %193 = vmatpush.msra.mxu0 %v188
    %194 = vmatpush.msra.mxu0 %v187
    %195 = vmatpush.msra.mxu0 %v186
    %196 = vmatpush.msra.mxu0 %v185
    %197 = vmatpush.msra.mxu0 %v184
    %198 = vmatpush.msra.mxu0 %v183
    %199 = vmatpush.msra.mxu0 %v182
    %200 = vmatpush.msra.mxu0 %v181
    %201 = vmatpush.msra.mxu0 %v180
    %202 = vmatpush.msra.mxu0 %v179
    %203 = vmatpush.msra.mxu0 %v178
    %204 = vmatpush.msra.mxu0 %v177
    %205 = vmatpush.msra.mxu0 %v176
    %206 = vmatpush.msra.mxu0 %v175
    %207 = vmatpush.msra.mxu0 %v174
    %208 = vmatpush.msra.mxu0 %v173
    %209 = vmatmul.f32.gmra.mxu0 %v172
    %v210 = vpop.f32.mrf.mxu0
    %v211 = vadd.f32 %v191, %v210
    %212 = vdwg.mxu0
    %v213 = vmul.f32 %v211, 0.5
    %v214 = vmul.f32 %v211, 0.70710677
    %v215 = vmul.f32 %v214, %v214
    %v216 = vmin.f32 16.0, %v215
    %v217 = vmul.f32 %v216, 2.1237322e-06
    %v218 = vadd.f32 %v217, 0.00028619796
    %v219 = vmul.f32 %v216, %v218
    %v220 = vadd.f32 %v219, 0.0036580483
    %v221 = vmul.f32 %v216, %v220
    %v222 = vadd.f32 %v221, 0.05243302
    %v223 = vmul.f32 %v216, %v222
    %v224 = vadd.f32 %v223, 0.18741608
    %v225 = vmul.f32 %v216, %v224
    %v226 = vadd.f32 %v225, 1.1283791
    %v227 = vmul.f32 %v214, %v226
    %v228 = vmul.f32 %v216, 3.8918573e-05
    %v229 = vadd.f32 %v228, 0.001143296
    %v230 = vmul.f32 %v216, %v229
    %v231 = vadd.f32 %v230, 0.014752088
    %v232 = vmul.f32 %v216, %v231
    %v233 = vadd.f32 %v232, 0.112945676
    %v234 = vmul.f32 %v216, %v233
    %v235 = vadd.f32 %v234, 0.4994258
    %v236 = vmul.f32 %v216, %v235
    %v237 = vadd.f32 %v236, 1.0
    %v238 = vrcp.pop %v237
    %v239 = vmul.f32 %v237, %v238
    %v240 = vsub.f32 1.0, %v239
    %v241 = vmul.f32 %v238, %v240
    %v242 = vadd.f32 %v238, %v241
    %vm243 = vweird.f32 %v237
    %vm244 = vweird.f32 %v238
    %vm245 = vmor %vm243, %vm244
    %v246 = vsel %vm245, %v238, %v242
    %v247 = vand.u32 2147483647, %v237
    %vm248 = vcmp.eq.f32.partialorder %v247, 8.507059e+37
    %v249 = vand.u32 %v237, 2147483648
    %v250 = vor.u32 1.1754944e-38, %v249
    %v251 = vsel %vm248, %v250, %v246
    %v252 = vmul.f32 %v227, %v251
    %v253 = vmin.f32 %v252, 1.0
    %v254 = vmax.f32 %v253, -1.0
    %v255 = vadd.f32 %v254, 1.0
    %v256 = vmul.f32 %v213, %v255
    %v257 = vld [vmem:[#allocation8] sm:$0xff]
    %v258 = vld [vmem:[#allocation8 + $0x8] sm:$0xff]
    %v259 = vld [vmem:[#allocation8 + $0x10] sm:$0xff]
    %v260 = vld [vmem:[#allocation8 + $0x18] sm:$0xff]
    %v261 = vld [vmem:[#allocation8 + $0x20] sm:$0xff]
    %v262 = vld [vmem:[#allocation8 + $0x28] sm:$0xff]
    %v263 = vld [vmem:[#allocation8 + $0x30] sm:$0xff]
    %v264 = vld [vmem:[#allocation8 + $0x38] sm:$0xff]
    %v265 = vld [vmem:[#allocation8 + $0x40] sm:$0xff]
    %v266 = vld [vmem:[#allocation8 + $0x48] sm:$0xff]
    %v267 = vld [vmem:[#allocation8 + $0x50] sm:$0xff]
    %v268 = vld [vmem:[#allocation8 + $0x58] sm:$0xff]
    %v269 = vld [vmem:[#allocation8 + $0x60] sm:$0xff]
    %v270 = vld [vmem:[#allocation8 + $0x68] sm:$0xff]
    %v271 = vld [vmem:[#allocation8 + $0x70] sm:$0xff]
    %v272 = vld [vmem:[#allocation8 + $0x78] sm:$0xff]
    %v273 = vld [vmem:[%s6] sm:$0x1]
    %v275 = vperm.slane %v273, 0
    %277 = vmatpush.msra.mxu0 %v272
    %278 = vmatpush.msra.mxu0 %v271
    %279 = vmatpush.msra.mxu0 %v270
    %280 = vmatpush.msra.mxu0 %v269
    %281 = vmatpush.msra.mxu0 %v268
    %282 = vmatpush.msra.mxu0 %v267
    %283 = vmatpush.msra.mxu0 %v266
    %284 = vmatpush.msra.mxu0 %v265
    %285 = vmatpush.msra.mxu0 %v264
    %286 = vmatpush.msra.mxu0 %v263
    %287 = vmatpush.msra.mxu0 %v262
    %288 = vmatpush.msra.mxu0 %v261
    %289 = vmatpush.msra.mxu0 %v260
    %290 = vmatpush.msra.mxu0 %v259
    %291 = vmatpush.msra.mxu0 %v258
    %292 = vmatpush.msra.mxu0 %v257
    %293 = vmatmul.f32.gmra.mxu0 %v256
    %v294 = vpop.f32.mrf.mxu0
    %v295 = vadd.f32 %v275, %v294
    %296 = vdwg.mxu0
    %297 = vst [vmem:[#allocation10] sm:$0xff] %v295
    // Predicated region
    $region46: #{tpu_custom_call.1} parent=1 // pred_check
      _
    $region47: #{tpu_custom_call.1} parent=1 // pred_check_branch
      %299 = sbr.rel (0) target = $region49
    $region48: #{tpu_custom_call.1} parent=1 // pred_region
      %301 = vsyncadd [#allocation4], 0
      %s303 = sshll.u32 [#allocation10], 4
      %s304 = int_to_ptr.vmem [resolvable:$true] %s303
      %s305 = sshll.u32 %s7, 4
      %s306 = int_to_ptr.hbm [resolvable:$true] %s305
      %308 = dma.vmem_to_hbm [thread:$0]  %s304, 128, %s306, [#allocation4]
    $region49: #{tpu_custom_call.1} parent=1 // pred_fallthru
      _
    // Predicated region
    $region50: #{tpu_custom_call.1} parent=1 // pred_check
      _
    $region51: #{tpu_custom_call.1} parent=1 // pred_check_branch
      %310 = sbr.rel (0) target = $region53
    $region52: #{tpu_custom_call.1} parent=1 // pred_region
      %312 = dma.done [#allocation4], 128
    $region53: #{tpu_custom_call.1} parent=1 // pred_fallthru
      _
    %313 = vsyncpa [#allocation3], 1
    %314 = vsyncpa [#allocation6], 1
    %315 = vsyncpa [#allocation9], 1
    %316 = vsyncpa [#allocation4], 1

// kernel: tpu_custom_call.1
$region0: #{tpu_custom_call.1}
  #allocation0 [shape = 'u32[]', space=smem, size = 0x4, offset = 0x4, fixed_abs, tag = 'smem constant byte address 0x4 - core index']
  #allocation1 [shape = 'u32[72,128]{1,0:T(1,128)}', space=vmem, size = 0x9000, scoped, tag = 'internal scratch']
  %s0 = inlined_call_operand.hbm [shape: f32[8,128], index: 0, kind: input, shape index: {}]
  %s1 = inlined_call_operand.hbm [shape: f32[128,128], index: 1, kind: input, shape index: {}]
  %s2 = inlined_call_operand.vmem [shape: f32[1,128], index: 2, kind: input, shape index: {}]
  %s3 = inlined_call_operand.hbm [shape: f32[128,128], index: 3, kind: input, shape index: {}]
  %s4 = inlined_call_operand.vmem [shape: f32[1,128], index: 4, kind: input, shape index: {}]
  %s5 = inlined_call_operand.hbm [shape: f32[128,128], index: 5, kind: input, shape index: {}]
  %s6 = inlined_call_operand.vmem [shape: f32[1,128], index: 6, kind: input, shape index: {}]
  %s7 = inlined_call_operand.hbm [shape: f32[8,128], index: 7, kind: output, shape index: {}]
  %s8 = sld [smem:[#allocation0]]
  $region54: #{tpu_custom_call.1} parent=0
    _
  %s10 = ssub.s32 1, %s8
  %s11 = scalar_select 0, %s10, %s8
  $region1: #{tpu_custom_call.1} parent=0
    #allocation2 [shape = 'u8[4096]{0}', space=vmem, size = 0x1000, scoped, tag = 'input window, operand 0, single buffered']
    #allocation3 [shape = 's32[1]{0}', space=sflag, size = 0x4, scoped, tag = 'scoped memory for tpu_custom_call.1']
    #allocation4 [shape = 's32[1]{0}', space=sflag, size = 0x4, scoped, tag = 'scoped memory for tpu_custom_call.1']
    #allocation5 [shape = 'u8[65536]{0}', space=vmem, size = 0x10000, scoped, tag = 'input window, operand 1, single buffered']
    #allocation6 [shape = 's32[1]{0}', space=sflag, size = 0x4, scoped, tag = 'scoped memory for tpu_custom_call.1']
    #allocation7 [shape = 'u8[65536]{0}', space=vmem, size = 0x10000, scoped, tag = 'input window, operand 3, single buffered']
    #allocation8 [shape = 'u8[65536]{0}', space=vmem, size = 0x10000, scoped, tag = 'input window, operand 5, single buffered']
    #allocation9 [shape = 's32[1]{0}', space=sflag, size = 0x4, scoped, tag = 'scoped memory for tpu_custom_call.1']
    #allocation10 [shape = 'u8[4096]{0}', space=vmem, size = 0x1000, scoped, tag = 'output window, operand 0, single buffered']
    %12 = vsyncpa [#allocation3], 0
    %13 = vsyncpa [#allocation6], 0
    %14 = vsyncpa [#allocation9], 0
    %15 = vsyncpa [#allocation4], 0
    // Predicated region
    $region2: #{tpu_custom_call.1} parent=1 // pred_check
      _
    $region3: #{tpu_custom_call.1} parent=1 // pred_check_branch
      %17 = sbr.rel (0) target = $region5
    $region4: #{tpu_custom_call.1} parent=1 // pred_region
      %19 = vsyncadd [#allocation3], 0
      %s21 = sshll.u32 %s0, 4
      %s22 = int_to_ptr.hbm [resolvable:$true] %s21
      %s23 = sshll.u32 [#allocation2], 4
      %s24 = int_to_ptr.vmem [resolvable:$true] %s23
      %26 = dma.hbm_to_vmem [thread:$0]  %s22, 128, %s24, [#allocation3]
    $region5: #{tpu_custom_call.1} parent=1 // pred_fallthru
      _
    // Predicated region
    $region6: #{tpu_custom_call.1} parent=1 // pred_check
      _
    $region7: #{tpu_custom_call.1} parent=1 // pred_check_branch
      %28 = sbr.rel (0) target = $region9
    $region8: #{tpu_custom_call.1} parent=1 // pred_region
      %30 = vsyncadd [#allocation6], 0
      %s31 = sshll.u32 %s1, 4
      %s32 = int_to_ptr.hbm [resolvable:$true] %s31
      %s33 = sshll.u32 [#allocation5], 4
      %s34 = int_to_ptr.vmem [resolvable:$true] %s33
      %39 = dma.hbm_to_vmem [thread:$0]  %s32, 2048, %s34, [#allocation6], 128, 128, 8
    $region9: #{tpu_custom_call.1} parent=1 // pred_fallthru
      _
    // Predicated region
    $region10: #{tpu_custom_call.1} parent=1 // pred_check
      _
    $region11: #{tpu_custom_call.1} parent=1 // pred_check_branch
      %41 = sbr.rel (0) target = $region13
    $region12: #{tpu_custom_call.1} parent=1 // pred_region
      _
    $region13: #{tpu_custom_call.1} parent=1 // pred_fallthru
      _
    // Predicated region
    $region14: #{tpu_custom_call.1} parent=1 // pred_check
      _
    $region15: #{tpu_custom_call.1} parent=1 // pred_check_branch
      %43 = sbr.rel (0) target = $region17
    $region16: #{tpu_custom_call.1} parent=1 // pred_region
      %45 = vsyncadd [#allocation6], 0
      %s46 = sshll.u32 %s3, 4
      %s47 = int_to_ptr.hbm [resolvable:$true] %s46
      %s48 = sshll.u32 [#allocation7], 4
      %s49 = int_to_ptr.vmem [resolvable:$true] %s48
      %54 = dma.hbm_to_vmem [thread:$0]  %s47, 2048, %s49, [#allocation6], 128, 128, 8
    $region17: #{tpu_custom_call.1} parent=1 // pred_fallthru
      _
    // Predicated region
    $region18: #{tpu_custom_call.1} parent=1 // pred_check
      _
    $region19: #{tpu_custom_call.1} parent=1 // pred_check_branch
      %56 = sbr.rel (0) target = $region21
    $region20: #{tpu_custom_call.1} parent=1 // pred_region
      _
    $region21: #{tpu_custom_call.1} parent=1 // pred_fallthru
      _
    // Predicated region
    $region22: #{tpu_custom_call.1} parent=1 // pred_check
      _
    $region23: #{tpu_custom_call.1} parent=1 // pred_check_branch
      %58 = sbr.rel (0) target = $region25
    $region24: #{tpu_custom_call.1} parent=1 // pred_region
      %60 = vsyncadd [#allocation9], 0
      %s61 = sshll.u32 %s5, 4
      %s62 = int_to_ptr.hbm [resolvable:$true] %s61
      %s63 = sshll.u32 [#allocation8], 4
      %s64 = int_to_ptr.vmem [resolvable:$true] %s63
      %69 = dma.hbm_to_vmem [thread:$0]  %s62, 2048, %s64, [#allocation9], 128, 128, 8
    $region25: #{tpu_custom_call.1} parent=1 // pred_fallthru
      _
    // Predicated region
    $region26: #{tpu_custom_call.1} parent=1 // pred_check
      _
    $region27: #{tpu_custom_call.1} parent=1 // pred_check_branch
      %71 = sbr.rel (0) target = $region29
    $region28: #{tpu_custom_call.1} parent=1 // pred_region
      _
    $region29: #{tpu_custom_call.1} parent=1 // pred_fallthru
      _
    // Predicated region
    $region30: #{tpu_custom_call.1} parent=1 // pred_check
      _
    $region31: #{tpu_custom_call.1} parent=1 // pred_check_branch
      %73 = sbr.rel (0) target = $region33
    $region32: #{tpu_custom_call.1} parent=1 // pred_region
      %75 = dma.done [#allocation3], 128
    $region33: #{tpu_custom_call.1} parent=1 // pred_fallthru
      _
    // Predicated region
    $region34: #{tpu_custom_call.1} parent=1 // pred_check
      _
    $region35: #{tpu_custom_call.1} parent=1 // pred_check_branch
      %77 = sbr.rel (0) target = $region37
    $region36: #{tpu_custom_call.1} parent=1 // pred_region
      %79 = dma.done [#allocation6], 2048
    $region37: #{tpu_custom_call.1} parent=1 // pred_fallthru
      _
    // Predicated region
    $region38: #{tpu_custom_call.1} parent=1 // pred_check
      _
    $region39: #{tpu_custom_call.1} parent=1 // pred_check_branch
      %81 = sbr.rel (0) target = $region41
    $region40: #{tpu_custom_call.1} parent=1 // pred_region
      %83 = dma.done [#allocation6], 2048
    $region41: #{tpu_custom_call.1} parent=1 // pred_fallthru
      _
    // Predicated region
    $region42: #{tpu_custom_call.1} parent=1 // pred_check
      _
    $region43: #{tpu_custom_call.1} parent=1 // pred_check_branch
      %85 = sbr.rel (0) target = $region45
    $region44: #{tpu_custom_call.1} parent=1 // pred_region
      %87 = dma.done [#allocation9], 2048
    $region45: #{tpu_custom_call.1} parent=1 // pred_fallthru
      _
    %v88 = vld [vmem:[#allocation2] sm:$0xff]
    %v89 = vld [vmem:[#allocation5] sm:$0xff]
    %v90 = vld [vmem:[#allocation5 + $0x8] sm:$0xff]
    %v91 = vld [vmem:[#allocation5 + $0x10] sm:$0xff]
    %v92 = vld [vmem:[#allocation5 + $0x18] sm:$0xff]
    %v93 = vld [vmem:[#allocation5 + $0x20] sm:$0xff]
    %v94 = vld [vmem:[#allocation5 + $0x28] sm:$0xff]
    %v95 = vld [vmem:[#allocation5 + $0x30] sm:$0xff]
    %v96 = vld [vmem:[#allocation5 + $0x38] sm:$0xff]
    %v97 = vld [vmem:[#allocation5 + $0x40] sm:$0xff]
    %v98 = vld [vmem:[#allocation5 + $0x48] sm:$0xff]
    %v99 = vld [vmem:[#allocation5 + $0x50] sm:$0xff]
    %v100 = vld [vmem:[#allocation5 + $0x58] sm:$0xff]
    %v101 = vld [vmem:[#allocation5 + $0x60] sm:$0xff]
    %v102 = vld [vmem:[#allocation5 + $0x68] sm:$0xff]
    %v103 = vld [vmem:[#allocation5 + $0x70] sm:$0xff]
    %v104 = vld [vmem:[#allocation5 + $0x78] sm:$0xff]
    %v105 = vld [vmem:[%s2] sm:$0x1]
    %v107 = vperm.slane %v105, 0
    %109 = vmatpush.msra.mxu0 %v104
    %110 = vmatpush.msra.mxu0 %v103
    %111 = vmatpush.msra.mxu0 %v102
    %112 = vmatpush.msra.mxu0 %v101
    %113 = vmatpush.msra.mxu0 %v100
    %114 = vmatpush.msra.mxu0 %v99
    %115 = vmatpush.msra.mxu0 %v98
    %116 = vmatpush.msra.mxu0 %v97
    %117 = vmatpush.msra.mxu0 %v96
    %118 = vmatpush.msra.mxu0 %v95
    %119 = vmatpush.msra.mxu0 %v94
    %120 = vmatpush.msra.mxu0 %v93
    %121 = vmatpush.msra.mxu0 %v92
    %122 = vmatpush.msra.mxu0 %v91
    %123 = vmatpush.msra.mxu0 %v90
    %124 = vmatpush.msra.mxu0 %v89
    %125 = vmatmul.f32.gmra.mxu0 %v88
    %v126 = vpop.f32.mrf.mxu0
    %v127 = vadd.f32 %v107, %v126
    %128 = vdwg.mxu0
    %v129 = vmul.f32 %v127, 0.5
    %v130 = vmul.f32 %v127, 0.70710677
    %v131 = vmul.f32 %v130, %v130
    %v132 = vmin.f32 16.0, %v131
    %v133 = vmul.f32 %v132, 2.1237322e-06
    %v134 = vadd.f32 %v133, 0.00028619796
    %v135 = vmul.f32 %v132, %v134
    %v136 = vadd.f32 %v135, 0.0036580483
    %v137 = vmul.f32 %v132, %v136
    %v138 = vadd.f32 %v137, 0.05243302
    %v139 = vmul.f32 %v132, %v138
    %v140 = vadd.f32 %v139, 0.18741608
    %v141 = vmul.f32 %v132, %v140
    %v142 = vadd.f32 %v141, 1.1283791
    %v143 = vmul.f32 %v130, %v142
    %v144 = vmul.f32 %v132, 3.8918573e-05
    %v145 = vadd.f32 %v144, 0.001143296
    %v146 = vmul.f32 %v132, %v145
    %v147 = vadd.f32 %v146, 0.014752088
    %v148 = vmul.f32 %v132, %v147
    %v149 = vadd.f32 %v148, 0.112945676
    %v150 = vmul.f32 %v132, %v149
    %v151 = vadd.f32 %v150, 0.4994258
    %v152 = vmul.f32 %v132, %v151
    %v153 = vadd.f32 %v152, 1.0
    %v154 = vrcp.pop %v153
    %v155 = vmul.f32 %v153, %v154
    %v156 = vsub.f32 1.0, %v155
    %v157 = vmul.f32 %v154, %v156
    %v158 = vadd.f32 %v154, %v157
    %vm159 = vweird.f32 %v153
    %vm160 = vweird.f32 %v154
    %vm161 = vmor %vm159, %vm160
    %v162 = vsel %vm161, %v154, %v158
    %v163 = vand.u32 2147483647, %v153
    %vm164 = vcmp.eq.f32.partialorder %v163, 8.507059e+37
    %v165 = vand.u32 %v153, 2147483648
    %v166 = vor.u32 1.1754944e-38, %v165
    %v167 = vsel %vm164, %v166, %v162
    %v168 = vmul.f32 %v143, %v167
    %v169 = vmin.f32 %v168, 1.0
    %v170 = vmax.f32 %v169, -1.0
    %v171 = vadd.f32 %v170, 1.0
    %v172 = vmul.f32 %v129, %v171
    %v173 = vld [vmem:[#allocation7] sm:$0xff]
    %v174 = vld [vmem:[#allocation7 + $0x8] sm:$0xff]
    %v175 = vld [vmem:[#allocation7 + $0x10] sm:$0xff]
    %v176 = vld [vmem:[#allocation7 + $0x18] sm:$0xff]
    %v177 = vld [vmem:[#allocation7 + $0x20] sm:$0xff]
    %v178 = vld [vmem:[#allocation7 + $0x28] sm:$0xff]
    %v179 = vld [vmem:[#allocation7 + $0x30] sm:$0xff]
    %v180 = vld [vmem:[#allocation7 + $0x38] sm:$0xff]
    %v181 = vld [vmem:[#allocation7 + $0x40] sm:$0xff]
    %v182 = vld [vmem:[#allocation7 + $0x48] sm:$0xff]
    %v183 = vld [vmem:[#allocation7 + $0x50] sm:$0xff]
    %v184 = vld [vmem:[#allocation7 + $0x58] sm:$0xff]
    %v185 = vld [vmem:[#allocation7 + $0x60] sm:$0xff]
    %v186 = vld [vmem:[#allocation7 + $0x68] sm:$0xff]
    %v187 = vld [vmem:[#allocation7 + $0x70] sm:$0xff]
    %v188 = vld [vmem:[#allocation7 + $0x78] sm:$0xff]
    %v189 = vld [vmem:[%s4] sm:$0x1]
    %v191 = vperm.slane %v189, 0
    %193 = vmatpush.msra.mxu0 %v188
    %194 = vmatpush.msra.mxu0 %v187
    %195 = vmatpush.msra.mxu0 %v186
    %196 = vmatpush.msra.mxu0 %v185
    %197 = vmatpush.msra.mxu0 %v184
    %198 = vmatpush.msra.mxu0 %v183
    %199 = vmatpush.msra.mxu0 %v182
    %200 = vmatpush.msra.mxu0 %v181
    %201 = vmatpush.msra.mxu0 %v180
    %202 = vmatpush.msra.mxu0 %v179
    %203 = vmatpush.msra.mxu0 %v178
    %204 = vmatpush.msra.mxu0 %v177
    %205 = vmatpush.msra.mxu0 %v176
    %206 = vmatpush.msra.mxu0 %v175
    %207 = vmatpush.msra.mxu0 %v174
    %208 = vmatpush.msra.mxu0 %v173
    %209 = vmatmul.f32.gmra.mxu0 %v172
    %v210 = vpop.f32.mrf.mxu0
    %v211 = vadd.f32 %v191, %v210
    %212 = vdwg.mxu0
    %v213 = vmul.f32 %v211, 0.5
    %v214 = vmul.f32 %v211, 0.70710677
    %v215 = vmul.f32 %v214, %v214
    %v216 = vmin.f32 16.0, %v215
    %v217 = vmul.f32 %v216, 2.1237322e-06
    %v218 = vadd.f32 %v217, 0.00028619796
    %v219 = vmul.f32 %v216, %v218
    %v220 = vadd.f32 %v219, 0.0036580483
    %v221 = vmul.f32 %v216, %v220
    %v222 = vadd.f32 %v221, 0.05243302
    %v223 = vmul.f32 %v216, %v222
    %v224 = vadd.f32 %v223, 0.18741608
    %v225 = vmul.f32 %v216, %v224
    %v226 = vadd.f32 %v225, 1.1283791
    %v227 = vmul.f32 %v214, %v226
    %v228 = vmul.f32 %v216, 3.8918573e-05
    %v229 = vadd.f32 %v228, 0.001143296
    %v230 = vmul.f32 %v216, %v229
    %v231 = vadd.f32 %v230, 0.014752088
    %v232 = vmul.f32 %v216, %v231
    %v233 = vadd.f32 %v232, 0.112945676
    %v234 = vmul.f32 %v216, %v233
    %v235 = vadd.f32 %v234, 0.4994258
    %v236 = vmul.f32 %v216, %v235
    %v237 = vadd.f32 %v236, 1.0
    %v238 = vrcp.pop %v237
    %v239 = vmul.f32 %v237, %v238
    %v240 = vsub.f32 1.0, %v239
    %v241 = vmul.f32 %v238, %v240
    %v242 = vadd.f32 %v238, %v241
    %vm243 = vweird.f32 %v237
    %vm244 = vweird.f32 %v238
    %vm245 = vmor %vm243, %vm244
    %v246 = vsel %vm245, %v238, %v242
    %v247 = vand.u32 2147483647, %v237
    %vm248 = vcmp.eq.f32.partialorder %v247, 8.507059e+37
    %v249 = vand.u32 %v237, 2147483648
    %v250 = vor.u32 1.1754944e-38, %v249
    %v251 = vsel %vm248, %v250, %v246
    %v252 = vmul.f32 %v227, %v251
    %v253 = vmin.f32 %v252, 1.0
    %v254 = vmax.f32 %v253, -1.0
    %v255 = vadd.f32 %v254, 1.0
    %v256 = vmul.f32 %v213, %v255
    %v257 = vld [vmem:[#allocation8] sm:$0xff]
    %v258 = vld [vmem:[#allocation8 + $0x8] sm:$0xff]
    %v259 = vld [vmem:[#allocation8 + $0x10] sm:$0xff]
    %v260 = vld [vmem:[#allocation8 + $0x18] sm:$0xff]
    %v261 = vld [vmem:[#allocation8 + $0x20] sm:$0xff]
    %v262 = vld [vmem:[#allocation8 + $0x28] sm:$0xff]
    %v263 = vld [vmem:[#allocation8 + $0x30] sm:$0xff]
    %v264 = vld [vmem:[#allocation8 + $0x38] sm:$0xff]
    %v265 = vld [vmem:[#allocation8 + $0x40] sm:$0xff]
    %v266 = vld [vmem:[#allocation8 + $0x48] sm:$0xff]
    %v267 = vld [vmem:[#allocation8 + $0x50] sm:$0xff]
    %v268 = vld [vmem:[#allocation8 + $0x58] sm:$0xff]
    %v269 = vld [vmem:[#allocation8 + $0x60] sm:$0xff]
    %v270 = vld [vmem:[#allocation8 + $0x68] sm:$0xff]
    %v271 = vld [vmem:[#allocation8 + $0x70] sm:$0xff]
    %v272 = vld [vmem:[#allocation8 + $0x78] sm:$0xff]
    %v273 = vld [vmem:[%s6] sm:$0x1]
    %v275 = vperm.slane %v273, 0
    %277 = vmatpush.msra.mxu0 %v272
    %278 = vmatpush.msra.mxu0 %v271
    %279 = vmatpush.msra.mxu0 %v270
    %280 = vmatpush.msra.mxu0 %v269
    %281 = vmatpush.msra.mxu0 %v268
    %282 = vmatpush.msra.mxu0 %v267
    %283 = vmatpush.msra.mxu0 %v266
    %284 = vmatpush.msra.mxu0 %v265
    %285 = vmatpush.msra.mxu0 %v264
    %286 = vmatpush.msra.mxu0 %v263
    %287 = vmatpush.msra.mxu0 %v262
    %288 = vmatpush.msra.mxu0 %v261
    %289 = vmatpush.msra.mxu0 %v260
    %290 = vmatpush.msra.mxu0 %v259
    %291 = vmatpush.msra.mxu0 %v258
    %292 = vmatpush.msra.mxu0 %v257
    %293 = vmatmul.f32.gmra.mxu0 %v256
    %v294 = vpop.f32.mrf.mxu0
    %v295 = vadd.f32 %v275, %v294
    %296 = vdwg.mxu0
    %297 = vst [vmem:[#allocation10] sm:$0xff] %v295
    // Predicated region
    $region46: #{tpu_custom_call.1} parent=1 // pred_check
      _
    $region47: #{tpu_custom_call.1} parent=1 // pred_check_branch
      %299 = sbr.rel (0) target = $region49
    $region48: #{tpu_custom_call.1} parent=1 // pred_region
      %301 = vsyncadd [#allocation4], 0
      %s303 = sshll.u32 [#allocation10], 4
      %s304 = int_to_ptr.vmem [resolvable:$true] %s303
      %s305 = sshll.u32 %s7, 4
      %s306 = int_to_ptr.hbm [resolvable:$true] %s305
      %308 = dma.vmem_to_hbm [thread:$0]  %s304, 128, %s306, [#allocation4]
    $region49: #{tpu_custom_call.1} parent=1 // pred_fallthru
      _
    // Predicated region
    $region50: #{tpu_custom_call.1} parent=1 // pred_check
      _
    $region51: #{tpu_custom_call.1} parent=1 // pred_check_branch
      %310 = sbr.rel (0) target = $region53
    $region52: #{tpu_custom_call.1} parent=1 // pred_region
      %312 = dma.done [#allocation4], 128
    $region53: #{tpu_custom_call.1} parent=1 // pred_fallthru
      _
    %313 = vsyncpa [#allocation3], 1
    %314 = vsyncpa [#allocation6], 1
    %315 = vsyncpa [#allocation9], 1
    %316 = vsyncpa [#allocation4], 1

</llo_original>
